<compile_context>
chip_gen: v7x
topology: tpu7x:2x2x1
jax: 0.10.0
libtpu: 0.0.40
codegen_flags: <defaults>
</compile_context>

<pallas_src>
import jax
import jax.numpy as jnp
from jax.experimental import pallas as pl
from jax.experimental.pallas import tpu as pltpu

_LANE = 128


def _conditioned_aux_kernel(x_ref, emb_ref, wx_ref, we_ref, b_ref, o_ref):
    """One batch-tile:
       x_ref   (TB, S)        state features (one row per batch element)
       emb_ref (TB*A, E)      gathered action embeddings (A rows per batch element)
       wx_ref  (S, Npad)      fused head weights, state part            (resident)
       we_ref  (E, Npad)      fused head weights with action_linear folded (resident)
       b_ref   (1, Npad)      fused bias                                 (resident)
       o_ref   (TB*A, Npad)   [logits | alpha | beta | 0-pad] slab
    """
    TB = x_ref.shape[0]
    A = emb_ref.shape[0] // TB
    n_pad = o_ref.shape[-1]

    # Per-batch-row contribution of the state features (plus bias): (TB, Npad).
    x_part = (
        jnp.dot(x_ref[...], wx_ref[...], preferred_element_type=jnp.float32)
        + b_ref[...]
    )

    # Per-(batch, action) contribution of the action embedding (action_linear is
    # already folded into we_ref in the wrapper): (TB*A, Npad).
    emb_part = jnp.dot(emb_ref[...], we_ref[...], preferred_element_type=jnp.float32)

    # Broadcast each batch row's state contribution across its A actions.
    # (TB, Npad) -> (TB, A, Npad) -> (TB*A, Npad); tile-aligned collapse (Npad=128).
    x_rep = jnp.broadcast_to(x_part[:, None, :], (TB, A, n_pad)).reshape(TB * A, n_pad)

    pre = emb_part + x_rep  # (TB*A, Npad) pre-activations for all heads

    # Column 0 -> Categorical logits (raw); columns 1..2C -> 1 + pre^2
    # (use_beta=True, softplus=False branch). Padding columns are garbage & sliced off.
    col = jax.lax.broadcasted_iota(jnp.int32, pre.shape, dimension=1)
    o_ref[...] = jnp.where(col == 0, pre, 1.0 + pre * pre).astype(o_ref.dtype)


def _pick_tile_b(batch, target):
    """Batch-tile size: full batch if small, else a multiple of 8 (sublane rule)."""
    if batch <= target:
        return batch
    return max(8, (target // 8) * 8)


def conditioned_aux_dist_forward(
    x, add_input, emb_table, params, *, compute_dtype=jnp.float32, tile_b=128
):
    """Returns (disc_logits (B, A), alpha (B, A, C), beta (B, A, C)).

    params (math layout, i.e. (in, out) weights, 1-D biases):
      w_act (E, H), b_act (H,)
      w_lin (S+H, 1), b_lin (1,)
      w_alpha (S+H, C), b_alpha (C,)
      w_beta  (S+H, C), b_beta  (C,)
    """
    B, S = x.shape
    A = add_input.shape[1]
    E = emb_table.shape[1]
    C = params["w_alpha"].shape[1]
    M = B * A

    n_out = 1 + 2 * C                                  # [logits | alpha | beta]
    n_pad = max(_LANE, pl.cdiv(n_out, _LANE) * _LANE)  # lane-dense output width

    # ---- one-time param folding (tiny XLA matmuls, "glue") --------------------
    # feat = [x | act] with act = emb @ w_act + b_act, so split each fused head
    # weight into a state part (first S rows) and a hidden part (last H rows),
    # then fold action_linear into the hidden part.
    w_head = jnp.concatenate(
        [params["w_lin"], params["w_alpha"], params["w_beta"]], axis=1
    )                                                   # (S+H, n_out)
    b_head = jnp.concatenate(
        [params["b_lin"], params["b_alpha"], params["b_beta"]], axis=0
    )                                                   # (n_out,)
    w_head_x = w_head[:S]                               # (S, n_out)
    w_head_h = w_head[S:]                               # (H, n_out)
    w_emb = params["w_act"] @ w_head_h                  # (E, n_out)
    b_fused = b_head + params["b_act"] @ w_head_h       # (n_out,)

    def _pad_cols(m):
        return jnp.pad(m, ((0, 0), (0, n_pad - n_out)))

    w_x = _pad_cols(w_head_x).astype(compute_dtype)            # (S, n_pad), resident
    w_e = _pad_cols(w_emb).astype(compute_dtype)               # (E, n_pad), resident
    b_f = _pad_cols(b_fused[None, :]).astype(jnp.float32)      # (1, n_pad), resident

    # Embedding gather (dist_mem.get_action_embeddings) — glue; see TODO(synk) above.
    emb_flat = (
        jnp.take(emb_table, add_input.astype(jnp.int32), axis=0)
        .reshape(M, E)
        .astype(compute_dtype)
    )
    xs = x.astype(compute_dtype)   # NOT replicated A× — broadcast happens in-kernel.

    TB = _pick_tile_b(B, tile_b)
    grid = (pl.cdiv(B, TB),)

    out = pl.pallas_call(
        _conditioned_aux_kernel,
        out_shape=jax.ShapeDtypeStruct((M, n_pad), jnp.float32),
        grid_spec=pltpu.PrefetchScalarGridSpec(
            num_scalar_prefetch=0,
            grid=grid,
            in_specs=[
                pl.BlockSpec((TB, S), lambda i: (i, 0)),          # x, streamed
                pl.BlockSpec((TB * A, E), lambda i: (i, 0)),      # emb, streamed
                pl.BlockSpec((S, n_pad), lambda i: (0, 0)),       # W_x, resident
                pl.BlockSpec((E, n_pad), lambda i: (0, 0)),       # W_e, resident
                pl.BlockSpec((1, n_pad), lambda i: (0, 0)),       # bias, resident
            ],
            out_specs=pl.BlockSpec((TB * A, n_pad), lambda i: (i, 0)),
        ),
        compiler_params=pltpu.CompilerParams(
            dimension_semantics=("parallel",),        # shard batch tiles across TCs
            vmem_limit_bytes=48 * 1024 * 1024,        # well inside v7x's 64 MiB VMEM
        ),
    )(xs, emb_flat, w_x, w_e, b_f)

    # Slice the lane-dense slab back into the module's three outputs (free plumbing).
    disc_logits = out[:, 0].reshape(B, A)
    alpha = out[:, 1 : 1 + C].reshape(B, A, C)
    beta = out[:, 1 + C : 1 + 2 * C].reshape(B, A, C)
    return disc_logits, alpha, beta


def _reference_forward(x, add_input, emb_table, params):
    """Pure-JAX reference mirroring the PyTorch forward (use_beta, no softplus)."""
    B, S = x.shape
    A = add_input.shape[1]
    action_embs = jnp.take(emb_table, add_input.astype(jnp.int32), axis=0)   # (B, A, E)
    act = action_embs @ params["w_act"] + params["b_act"]                    # (B, A, H)
    feat = jnp.concatenate(
        [jnp.broadcast_to(x[:, None, :], (B, A, S)), act], axis=-1
    )                                                                        # (B, A, S+H)
    logits = (feat @ params["w_lin"] + params["b_lin"])[..., 0]              # (B, A)
    alpha = 1.0 + (feat @ params["w_alpha"] + params["b_alpha"]) ** 2
    beta = 1.0 + (feat @ params["w_beta"] + params["b_beta"]) ** 2
    return logits, alpha, beta


if __name__ == "__main__":
    # Small shapes consistent with the module.
    B = 2        # batch
    S = 32       # state_size
    E = 16       # action_dim (z_dim)
    H = 32       # dist_hidden_dim
    A = 8        # number of available actions per row (add_input width)
    C = 2        # cont_output_size
    N_EMB = 10   # rows in the dist_mem embedding table

    key = jax.random.PRNGKey(0)
    ks = jax.random.split(key, 13)

    emb_table = jax.random.normal(ks[0], (N_EMB, E), jnp.float32)
    params = {
        "w_act": 0.01 * jax.random.normal(ks[1], (E, H), jnp.float32),
        "b_act": 0.01 * jax.random.normal(ks[2], (H,), jnp.float32),
        "w_lin": 0.01 * jax.random.normal(ks[3], (S + H, 1), jnp.float32),
        "b_lin": 0.01 * jax.random.normal(ks[4], (1,), jnp.float32),
        "w_alpha": jax.random.normal(ks[5], (S + H, C), jnp.float32) / jnp.sqrt(S + H),
        "b_alpha": 0.01 * jax.random.normal(ks[6], (C,), jnp.float32),
        "w_beta": jax.random.normal(ks[7], (S + H, C), jnp.float32) / jnp.sqrt(S + H),
        "b_beta": 0.01 * jax.random.normal(ks[8], (C,), jnp.float32),
    }

    x = jax.random.normal(ks[9], (B, S), jnp.float32)
    add_input = jax.random.randint(ks[10], (B, A), 0, N_EMB, jnp.int32)  # aval_actions

    # Note on tolerances: TPU f32 matmuls use reduced-precision (bf16-pass) MXU
    # arithmetic by default, and folding action_linear into the head weights
    # regroups the accumulation, so we compare at a bf16-pass-safe tolerance.
    TOL = dict(atol=5e-2, rtol=2e-2)

    # --- test 1: f32 streaming operands, single grid step ----------------------
    logits, alpha, beta = conditioned_aux_dist_forward(x, add_input, emb_table, params)
    jax.block_until_ready((logits, alpha, beta))
    ref_l, ref_a, ref_b = _reference_forward(x, add_input, emb_table, params)
    assert logits.shape == (B, A) and alpha.shape == (B, A, C) and beta.shape == (B, A, C)
    assert jnp.allclose(logits, ref_l, **TOL)
    assert jnp.allclose(alpha, ref_a, **TOL)
    assert jnp.allclose(beta, ref_b, **TOL)

    # --- test 2: multi-step pipelined grid over batch tiles ---------------------
    B2 = 40
    x2 = jax.random.normal(ks[11], (B2, S), jnp.float32)
    add2 = jax.random.randint(ks[12], (B2, A), 0, N_EMB, jnp.int32)
    l2, a2, b2 = conditioned_aux_dist_forward(x2, add2, emb_table, params, tile_b=8)
    jax.block_until_ready((l2, a2, b2))
    r_l2, r_a2, r_b2 = _reference_forward(x2, add2, emb_table, params)
    assert jnp.allclose(l2, r_l2, **TOL)
    assert jnp.allclose(a2, r_a2, **TOL)
    assert jnp.allclose(b2, r_b2, **TOL)

    # --- test 3: bf16 streaming operands (mem-bound optimization) ---------------
    l3, a3, b3 = conditioned_aux_dist_forward(
        x, add_input, emb_table, params, compute_dtype=jnp.bfloat16
    )
    jax.block_until_ready((l3, a3, b3))
    assert jnp.allclose(l3, ref_l, atol=1e-1, rtol=1e-1)
    assert jnp.allclose(a3, ref_a, atol=1e-1, rtol=1e-1)
    assert jnp.allclose(b3, ref_b, atol=1e-1, rtol=1e-1)

    print("KERNEL_OK")
</pallas_src>

<mosaic_0001>
module attributes {stable_mosaic.version = 11 : i64} {
  func.func @_conditioned_aux_kernel(%arg0: i32, %arg1: memref<2x32xf32, #tpu.memory_space<vmem>>, %arg2: memref<16x16xf32, #tpu.memory_space<vmem>>, %arg3: memref<32x128xf32, #tpu.memory_space<vmem>>, %arg4: memref<16x128xf32, #tpu.memory_space<vmem>>, %arg5: memref<1x128xf32, #tpu.memory_space<vmem>>, %arg6: memref<16x128xf32, #tpu.memory_space<vmem>>) attributes {dimension_semantics = [#tpu.dimension_semantics<parallel>], iteration_bounds = array<i64: 1>, scalar_prefetch = 0 : i64, scratch_operands = 0 : i64, tpu.core_type = #tpu.core_type<tc>, window_params = [{transform_indices = @transform_0, window_bounds = array<i64: 2, 32>}, {transform_indices = @transform_1, window_bounds = array<i64: 16, 16>}, {pipeline_mode = #tpu.pipeline_mode<synchronous>, transform_indices = @transform_2, window_bounds = array<i64: 32, 128>}, {pipeline_mode = #tpu.pipeline_mode<synchronous>, transform_indices = @transform_3, window_bounds = array<i64: 16, 128>}, {pipeline_mode = #tpu.pipeline_mode<synchronous>, transform_indices = @transform_4, window_bounds = array<i64: 1, 128>}, {transform_indices = @transform_5, window_bounds = array<i64: 16, 128>}]} {
    %c0 = arith.constant 0 : index
    %c0_0 = arith.constant 0 : index
    %0 = vector.load %arg1[%c0, %c0_0] : memref<2x32xf32, #tpu.memory_space<vmem>>, vector<2x32xf32>
    %c0_1 = arith.constant 0 : index
    %c0_2 = arith.constant 0 : index
    %1 = vector.load %arg3[%c0_1, %c0_2] : memref<32x128xf32, #tpu.memory_space<vmem>>, vector<32x128xf32>
    %cst = arith.constant dense<0.000000e+00> : vector<2x128xf32>
    %2 = tpu.matmul %0, %1, %cst {dimension_numbers = #tpu.dot_dimension_numbers<[1], [0], [0], [1], [0, 0, 1, 1], [], []>} : vector<2x32xf32>, vector<32x128xf32>, vector<2x128xf32> -> vector<2x128xf32>
    %c0_3 = arith.constant 0 : index
    %c0_4 = arith.constant 0 : index
    %3 = vector.load %arg5[%c0_3, %c0_4] : memref<1x128xf32, #tpu.memory_space<vmem>>, vector<1x128xf32>
    %4 = vector.broadcast %3 : vector<1x128xf32> to vector<2x128xf32>
    %5 = arith.addf %2, %4 : vector<2x128xf32>
    %c0_5 = arith.constant 0 : index
    %c0_6 = arith.constant 0 : index
    %6 = vector.load %arg2[%c0_5, %c0_6] : memref<16x16xf32, #tpu.memory_space<vmem>>, vector<16x16xf32>
    %c0_7 = arith.constant 0 : index
    %c0_8 = arith.constant 0 : index
    %7 = vector.load %arg4[%c0_7, %c0_8] : memref<16x128xf32, #tpu.memory_space<vmem>>, vector<16x128xf32>
    %cst_9 = arith.constant dense<0.000000e+00> : vector<16x128xf32>
    %8 = tpu.matmul %6, %7, %cst_9 {dimension_numbers = #tpu.dot_dimension_numbers<[1], [0], [0], [1], [0, 0, 1, 1], [], []>} : vector<16x16xf32>, vector<16x128xf32>, vector<16x128xf32> -> vector<16x128xf32>
    %9 = vector.shape_cast %5 : vector<2x128xf32> to vector<2x1x128xf32>
    %10 = vector.shape_cast %9 : vector<2x1x128xf32> to vector<2x1x128xf32>
    %11 = vector.broadcast %10 : vector<2x1x128xf32> to vector<2x8x128xf32>
    %12 = vector.shape_cast %11 : vector<2x8x128xf32> to vector<16x128xf32>
    %13 = arith.addf %8, %12 : vector<16x128xf32>
    %14 = tpu.iota {dimensions = array<i32: 1>} : vector<16x128xi32>
    %c0_i32 = arith.constant 0 : i32
    %15 = vector.broadcast %c0_i32 : i32 to vector<16x128xi32>
    %16 = arith.cmpi eq, %14, %15 : vector<16x128xi32>
    %17 = arith.mulf %13, %13 : vector<16x128xf32>
    %cst_10 = arith.constant 1.000000e+00 : f32
    %18 = vector.broadcast %cst_10 : f32 to vector<16x128xf32>
    %19 = arith.addf %18, %17 : vector<16x128xf32>
    %20 = arith.select %16, %13, %19 : vector<16x128xi1>, vector<16x128xf32>
    %c0_11 = arith.constant 0 : index
    %c0_12 = arith.constant 0 : index
    %21 = vector.load %arg6[%c0_11, %c0_12] : memref<16x128xf32, #tpu.memory_space<vmem>>, vector<16x128xf32>
    tpu.vector_store %arg6[%c0_11, %c0_12], %20 {strides = array<i32>} : memref<16x128xf32, #tpu.memory_space<vmem>>, vector<16x128xf32>,
    return
  }
  func.func @transform_0(%arg0: i32) -> (i32, i32) {
    %c0_i32 = arith.constant 0 : i32
    %c0_i32_0 = arith.constant 0 : i32
    return %arg0, %c0_i32 : i32, i32
  }
  func.func @transform_1(%arg0: i32) -> (i32, i32) {
    %c0_i32 = arith.constant 0 : i32
    %c0_i32_0 = arith.constant 0 : i32
    return %arg0, %c0_i32 : i32, i32
  }
  func.func @transform_2(%arg0: i32) -> (i32, i32) {
    %c0_i32 = arith.constant 0 : i32
    %c0_i32_0 = arith.constant 0 : i32
    %c0_i32_1 = arith.constant 0 : i32
    return %c0_i32, %c0_i32_0 : i32, i32
  }
  func.func @transform_3(%arg0: i32) -> (i32, i32) {
    %c0_i32 = arith.constant 0 : i32
    %c0_i32_0 = arith.constant 0 : i32
    %c0_i32_1 = arith.constant 0 : i32
    return %c0_i32, %c0_i32_0 : i32, i32
  }
  func.func @transform_4(%arg0: i32) -> (i32, i32) {
    %c0_i32 = arith.constant 0 : i32
    %c0_i32_0 = arith.constant 0 : i32
    %c0_i32_1 = arith.constant 0 : i32
    return %c0_i32, %c0_i32_0 : i32, i32
  }
  func.func @transform_5(%arg0: i32) -> (i32, i32) {
    %c0_i32 = arith.constant 0 : i32
    %c0_i32_0 = arith.constant 0 : i32
    return %arg0, %c0_i32 : i32, i32
  }
}

</mosaic_0001>

<llo_original>
// kernel: tpu_custom_call.1
$region0: #{tpu_custom_call.1}
  #allocation0 [shape = 'u32[]', space=smem, size = 0x4, offset = 0x4, fixed_abs, tag = 'smem constant byte address 0x4 - core index']
  #allocation1 [shape = 'u32[144,128]{1,0:T(1,128)}', space=vmem, size = 0x12000, scoped, tag = 'internal scratch']
  %s0 = inlined_call_operand.hbm [shape: f32[2,32], index: 0, kind: input, shape index: {}]
  %s1 = inlined_call_operand.hbm [shape: f32[16,16], index: 1, kind: input, shape index: {}]
  %s2 = inlined_call_operand.hbm [shape: f32[32,128], index: 2, kind: input, shape index: {}]
  %s3 = inlined_call_operand.hbm [shape: f32[16,128], index: 3, kind: input, shape index: {}]
  %s4 = inlined_call_operand.vmem [shape: f32[1,128], index: 4, kind: input, shape index: {}]
  %s5 = inlined_call_operand.hbm [shape: f32[16,128], index: 5, kind: output, shape index: {}]
  %s6 = sld [smem:[#allocation0]]
  $region46: #{tpu_custom_call.1} parent=0
    _
  %s8 = ssub.s32 1, %s6
  %s9 = scalar_select 0, %s8, %s6
  $region1: #{tpu_custom_call.1} parent=0
    #allocation2 [shape = 'u8[1024]{0}', space=vmem, size = 0x400, scoped, tag = 'input window, operand 0, single buffered']
    #allocation3 [shape = 's32[1]{0}', space=sflag, size = 0x4, scoped, tag = 'scoped memory for tpu_custom_call.1']
    #allocation4 [shape = 's32[1]{0}', space=sflag, size = 0x4, scoped, tag = 'scoped memory for tpu_custom_call.1']
    #allocation5 [shape = 'u8[8192]{0}', space=vmem, size = 0x2000, scoped, tag = 'input window, operand 1, single buffered']
    #allocation6 [shape = 's32[1]{0}', space=sflag, size = 0x4, scoped, tag = 'scoped memory for tpu_custom_call.1']
    #allocation7 [shape = 'u8[16384]{0}', space=vmem, size = 0x4000, scoped, tag = 'input window, operand 2, single buffered']
    #allocation8 [shape = 'u8[8192]{0}', space=vmem, size = 0x2000, scoped, tag = 'input window, operand 3, single buffered']
    #allocation9 [shape = 's32[1]{0}', space=sflag, size = 0x4, scoped, tag = 'scoped memory for tpu_custom_call.1']
    #allocation10 [shape = 'u8[8192]{0}', space=vmem, size = 0x2000, scoped, tag = 'output window, operand 0, single buffered']
    %10 = vsyncpa [#allocation3], 0
    %11 = vsyncpa [#allocation6], 0
    %12 = vsyncpa [#allocation9], 0
    %13 = vsyncpa [#allocation4], 0
    // Predicated region
    $region2: #{tpu_custom_call.1} parent=1 // pred_check
      _
    $region3: #{tpu_custom_call.1} parent=1 // pred_check_branch
      %15 = sbr.rel (0) target = $region5
    $region4: #{tpu_custom_call.1} parent=1 // pred_region
      %s17 = ssub.s32 32, 32
      %18 = vsyncadd [#allocation3], %s17
      %s20 = sshll.u32 [#allocation2], 4
      %s21 = int_to_ptr.vmem [resolvable:$true] %s20
      %23 = dma.hbm_to_vmem [thread:$0]  %s0, 32, %s21, [#allocation3]
    $region5: #{tpu_custom_call.1} parent=1 // pred_fallthru
      _
    // Predicated region
    $region6: #{tpu_custom_call.1} parent=1 // pred_check
      _
    $region7: #{tpu_custom_call.1} parent=1 // pred_check_branch
      %25 = sbr.rel (0) target = $region9
    $region8: #{tpu_custom_call.1} parent=1 // pred_region
      %s27 = ssub.s32 256, 256
      %28 = vsyncadd [#allocation6], %s27
      %s29 = sshll.u32 [#allocation5], 4
      %s30 = int_to_ptr.vmem [resolvable:$true] %s29
      %35 = dma.hbm_to_vmem [thread:$0]  %s1, 256, %s30, [#allocation6], 128, 128, 8
    $region9: #{tpu_custom_call.1} parent=1 // pred_fallthru
      _
    // Predicated region
    $region10: #{tpu_custom_call.1} parent=1 // pred_check
      _
    $region11: #{tpu_custom_call.1} parent=1 // pred_check_branch
      %37 = sbr.rel (0) target = $region13
    $region12: #{tpu_custom_call.1} parent=1 // pred_region
      %s39 = ssub.s32 512, 512
      %40 = vsyncadd [#allocation6], %s39
      %s41 = sshll.u32 [#allocation7], 4
      %s42 = int_to_ptr.vmem [resolvable:$true] %s41
      %47 = dma.hbm_to_vmem [thread:$0]  %s2, 512, %s42, [#allocation6], 128, 128, 8
    $region13: #{tpu_custom_call.1} parent=1 // pred_fallthru
      _
    // Predicated region
    $region14: #{tpu_custom_call.1} parent=1 // pred_check
      _
    $region15: #{tpu_custom_call.1} parent=1 // pred_check_branch
      %49 = sbr.rel (0) target = $region17
    $region16: #{tpu_custom_call.1} parent=1 // pred_region
      %s51 = ssub.s32 256, 256
      %52 = vsyncadd [#allocation9], %s51
      %s53 = sshll.u32 [#allocation8], 4
      %s54 = int_to_ptr.vmem [resolvable:$true] %s53
      %59 = dma.hbm_to_vmem [thread:$0]  %s3, 256, %s54, [#allocation9], 128, 128, 8
    $region17: #{tpu_custom_call.1} parent=1 // pred_fallthru
      _
    // Predicated region
    $region18: #{tpu_custom_call.1} parent=1 // pred_check
      _
    $region19: #{tpu_custom_call.1} parent=1 // pred_check_branch
      %61 = sbr.rel (0) target = $region21
    $region20: #{tpu_custom_call.1} parent=1 // pred_region
      _
    $region21: #{tpu_custom_call.1} parent=1 // pred_fallthru
      _
    // Predicated region
    $region22: #{tpu_custom_call.1} parent=1 // pred_check
      _
    $region23: #{tpu_custom_call.1} parent=1 // pred_check_branch
      %63 = sbr.rel (0) target = $region25
    $region24: #{tpu_custom_call.1} parent=1 // pred_region
      %64 = dma.done [#allocation3], 32
    $region25: #{tpu_custom_call.1} parent=1 // pred_fallthru
      _
    // Predicated region
    $region26: #{tpu_custom_call.1} parent=1 // pred_check
      _
    $region27: #{tpu_custom_call.1} parent=1 // pred_check_branch
      %66 = sbr.rel (0) target = $region29
    $region28: #{tpu_custom_call.1} parent=1 // pred_region
      %67 = dma.done [#allocation6], 256
    $region29: #{tpu_custom_call.1} parent=1 // pred_fallthru
      _
    // Predicated region
    $region30: #{tpu_custom_call.1} parent=1 // pred_check
      _
    $region31: #{tpu_custom_call.1} parent=1 // pred_check_branch
      %69 = sbr.rel (0) target = $region33
    $region32: #{tpu_custom_call.1} parent=1 // pred_region
      %70 = dma.done [#allocation6], 512
    $region33: #{tpu_custom_call.1} parent=1 // pred_fallthru
      _
    // Predicated region
    $region34: #{tpu_custom_call.1} parent=1 // pred_check
      _
    $region35: #{tpu_custom_call.1} parent=1 // pred_check_branch
      %72 = sbr.rel (0) target = $region37
    $region36: #{tpu_custom_call.1} parent=1 // pred_region
      %73 = dma.done [#allocation9], 256
    $region37: #{tpu_custom_call.1} parent=1 // pred_fallthru
      _
    %v74 = vld [vmem:[#allocation2] sm:$0x3]
    %v75 = vld [vmem:[#allocation7] sm:$0xff]
    %v76 = vld [vmem:[#allocation7 + $0x8] sm:$0xff]
    %v77 = vld [vmem:[#allocation7 + $0x10] sm:$0xff]
    %v78 = vld [vmem:[#allocation7 + $0x18] sm:$0xff]
    %v79 = vld [vmem:[%s4] sm:$0x1]
    %v81 = vlaneseq
    %v82 = vshrl.u32 %v81, 7
    %v83 = vsub.s32 0, %v82
    %v84 = vrot.slane %v79, %v83
    %vm86 = vcmask 261120
    %v88 = vsel %vm86, %v74, 0
    %90 = vmatprep.subr.mxu0 0.0
    %91 = vmatpush1.msra.mxu0 %v75
    %92 = vmatprep.subr.mxu0 0.0
    %93 = vmatpush1.msra.mxu0 %v76
    %94 = vmatprep.subr.mxu0 0.0
    %95 = vmatpush1.msra.mxu0 %v77
    %96 = vmatprep.subr.mxu0 0.0
    %97 = vmatpush1.msra.mxu0 %v78
    %98 = vmatprep.subr.mxu0 0.0
    %99 = vmatpush1.msra.mxu0 0.0
    %100 = vmatprep.subr.mxu0 0.0
    %101 = vmatpush1.msra.mxu0 0.0
    %102 = vmatprep.subr.mxu0 0.0
    %103 = vmatpush1.msra.mxu0 0.0
    %104 = vmatprep.subr.mxu0 0.0
    %105 = vmatpush1.msra.mxu0 0.0
    %106 = vmatprep.subr.mxu0 0.0
    %107 = vmatpush1.msra.mxu0 0.0
    %108 = vmatprep.subr.mxu0 0.0
    %109 = vmatpush1.msra.mxu0 0.0
    %110 = vmatprep.subr.mxu0 0.0
    %111 = vmatpush1.msra.mxu0 0.0
    %112 = vmatprep.subr.mxu0 0.0
    %113 = vmatpush1.msra.mxu0 0.0
    %114 = vmatprep.subr.mxu0 0.0
    %115 = vmatpush1.msra.mxu0 0.0
    %116 = vmatprep.subr.mxu0 0.0
    %117 = vmatpush1.msra.mxu0 0.0
    %118 = vmatprep.subr.mxu0 0.0
    %119 = vmatpush1.msra.mxu0 0.0
    %120 = vmatprep.subr.mxu0 0.0
    %121 = vmatpush1.msra.mxu0 0.0
    %122 = vmatprep.subr.mxu0 0.0
    %123 = vmatpush1.msra.mxu0 0.0
    %124 = vmatprep.subr.mxu0 0.0
    %125 = vmatpush1.msra.mxu0 0.0
    %126 = vmatprep.subr.mxu0 0.0
    %127 = vmatpush1.msra.mxu0 0.0
    %128 = vmatprep.subr.mxu0 0.0
    %129 = vmatpush1.msra.mxu0 0.0
    %130 = vmatprep.subr.mxu0 0.0
    %131 = vmatpush1.msra.mxu0 0.0
    %132 = vmatprep.subr.mxu0 0.0
    %133 = vmatpush1.msra.mxu0 0.0
    %134 = vmatprep.subr.mxu0 0.0
    %135 = vmatpush1.msra.mxu0 0.0
    %136 = vmatprep.subr.mxu0 0.0
    %137 = vmatpush1.msra.mxu0 0.0
    %138 = vmatprep.subr.mxu0 0.0
    %139 = vmatpush1.msra.mxu0 0.0
    %140 = vmatprep.subr.mxu0 0.0
    %141 = vmatpush1.msra.mxu0 0.0
    %142 = vmatprep.subr.mxu0 0.0
    %143 = vmatpush1.msra.mxu0 0.0
    %144 = vmatprep.subr.mxu0 0.0
    %145 = vmatpush1.msra.mxu0 0.0
    %146 = vmatprep.subr.mxu0 0.0
    %147 = vmatpush1.msra.mxu0 0.0
    %148 = vmatprep.subr.mxu0 0.0
    %149 = vmatpush1.msra.mxu0 0.0
    %150 = vmatprep.subr.mxu0 0.0
    %151 = vmatpush1.msra.mxu0 0.0
    %152 = vmatprep.subr.mxu0 0.0
    %153 = vmatpush1.msra.mxu0 0.0
    %154 = vmatprep.mubr.f32.mxu0 0.0
    %155 = vmatmul.mubr.f32.gmra.mrb[0].mxu0 %v88
    %v156 = vpop.f32.mrb[0].mxu0
    %v157 = vadd.f32 %v84, %v156
    %v158 = vpop.f32.mrb[0].mxu0
    %159 = vdwg.mxu0
    %v160 = vld [vmem:[#allocation5] sm:$0xff]
    %v161 = vld [vmem:[#allocation5 + $0x8] sm:$0xff]
    %v162 = vld [vmem:[#allocation8] sm:$0xff]
    %v163 = vld [vmem:[#allocation8 + $0x8] sm:$0xff]
    %v166 = vunpack.c.l.s4 1966171168
    %v167 = vunpack.c.0.s8 %v166
    %v168 = vlaneseq
    %v169 = vshrl.u32 %v168, 7
    %v170 = vsub.s32 %v167, %v169
    %v171 = vrot.slane %v157, %v170
    %v172 = vcombine.high %v171, %v171
    %v174 = vunpack.c.l.s4 1966171168
    %v175 = vunpack.c.0.s8 %v174
    %v176 = vlaneseq
    %v177 = vshrl.u32 %v176, 7
    %v178 = vsub.s32 %v175, %v177
    %v179 = vrot.slane %v171, %v178
    %v181 = vunpack.c.l.s4 1966171168
    %v182 = vunpack.c.0.s8 %v181
    %v183 = vlaneseq
    %v184 = vshrl.u32 %v183, 7
    %v185 = vsub.s32 %v182, %v184
    %v186 = vrot.slane %v172, %v185
    %v187 = vlaneseq
    %v188 = vshrl.u32 %v187, 7
    %v189 = vsub.s32 0, %v188
    %v190 = vrot.slane %v179, %v189
    %v191 = vlaneseq
    %v192 = vshrl.u32 %v191, 7
    %v193 = vsub.s32 0, %v192
    %v194 = vrot.slane %v186, %v193
    %vm197 = vcmask 130048
    %v199 = vsel %vm197, %v160, 0
    %v202 = vsel %vm197, %v161, 0
    %204 = vmatprep.subr.mxu0 0.0
    %205 = vmatpush1.msra.mxu0 %v162
    %206 = vmatprep.subr.mxu0 0.0
    %207 = vmatpush1.msra.mxu0 %v163
    %208 = vmatprep.subr.mxu0 0.0
    %209 = vmatpush1.msra.mxu0 0.0
    %210 = vmatprep.subr.mxu0 0.0
    %211 = vmatpush1.msra.mxu0 0.0
    %212 = vmatprep.subr.mxu0 0.0
    %213 = vmatpush1.msra.mxu0 0.0
    %214 = vmatprep.subr.mxu0 0.0
    %215 = vmatpush1.msra.mxu0 0.0
    %216 = vmatprep.subr.mxu0 0.0
    %217 = vmatpush1.msra.mxu0 0.0
    %218 = vmatprep.subr.mxu0 0.0
    %219 = vmatpush1.msra.mxu0 0.0
    %220 = vmatprep.subr.mxu0 0.0
    %221 = vmatpush1.msra.mxu0 0.0
    %222 = vmatprep.subr.mxu0 0.0
    %223 = vmatpush1.msra.mxu0 0.0
    %224 = vmatprep.subr.mxu0 0.0
    %225 = vmatpush1.msra.mxu0 0.0
    %226 = vmatprep.subr.mxu0 0.0
    %227 = vmatpush1.msra.mxu0 0.0
    %228 = vmatprep.subr.mxu0 0.0
    %229 = vmatpush1.msra.mxu0 0.0
    %230 = vmatprep.subr.mxu0 0.0
    %231 = vmatpush1.msra.mxu0 0.0
    %232 = vmatprep.subr.mxu0 0.0
    %233 = vmatpush1.msra.mxu0 0.0
    %234 = vmatprep.subr.mxu0 0.0
    %235 = vmatpush1.msra.mxu0 0.0
    %236 = vmatprep.subr.mxu0 0.0
    %237 = vmatpush1.msra.mxu0 0.0
    %238 = vmatprep.subr.mxu0 0.0
    %239 = vmatpush1.msra.mxu0 0.0
    %240 = vmatprep.subr.mxu0 0.0
    %241 = vmatpush1.msra.mxu0 0.0
    %242 = vmatprep.subr.mxu0 0.0
    %243 = vmatpush1.msra.mxu0 0.0
    %244 = vmatprep.subr.mxu0 0.0
    %245 = vmatpush1.msra.mxu0 0.0
    %246 = vmatprep.subr.mxu0 0.0
    %247 = vmatpush1.msra.mxu0 0.0
    %248 = vmatprep.subr.mxu0 0.0
    %249 = vmatpush1.msra.mxu0 0.0
    %250 = vmatprep.subr.mxu0 0.0
    %251 = vmatpush1.msra.mxu0 0.0
    %252 = vmatprep.subr.mxu0 0.0
    %253 = vmatpush1.msra.mxu0 0.0
    %254 = vmatprep.subr.mxu0 0.0
    %255 = vmatpush1.msra.mxu0 0.0
    %256 = vmatprep.subr.mxu0 0.0
    %257 = vmatpush1.msra.mxu0 0.0
    %258 = vmatprep.subr.mxu0 0.0
    %259 = vmatpush1.msra.mxu0 0.0
    %260 = vmatprep.subr.mxu0 0.0
    %261 = vmatpush1.msra.mxu0 0.0
    %262 = vmatprep.subr.mxu0 0.0
    %263 = vmatpush1.msra.mxu0 0.0
    %264 = vmatprep.subr.mxu0 0.0
    %265 = vmatpush1.msra.mxu0 0.0
    %266 = vmatprep.subr.mxu0 0.0
    %267 = vmatpush1.msra.mxu0 0.0
    %268 = vmatprep.mubr.f32.mxu0 0.0
    %269 = vmatmul.mubr.f32.gmra.mrb[0].mxu0 %v199
    %v270 = vpop.f32.mrb[0].mxu0
    %v271 = vadd.f32 %v190, %v270
    %v272 = vpop.f32.mrb[0].mxu0
    %273 = vmatprep.mubr.f32.mxu0 0.0
    %274 = vmatmul.mubr.f32.gmra.mrb[0].mxu0 %v202
    %v275 = vpop.f32.mrb[0].mxu0
    %v276 = vadd.f32 %v194, %v275
    %v277 = vpop.f32.mrb[0].mxu0
    %278 = vdwg.mxu0
    %v279 = vlaneseq
    %v280 = vand.u32 %v279, 127
    %vm281 = vcmp.eq.s32.totalorder %v280, 0
    %v282 = vmul.f32 %v271, %v271
    %v283 = vmul.f32 %v276, %v276
    %v284 = vadd.f32 %v282, 1.0
    %v285 = vadd.f32 %v283, 1.0
    %v286 = vsel %vm281, %v271, %v284
    %v287 = vsel %vm281, %v276, %v285
    %288 = vst [vmem:[#allocation10] sm:$0xff] %v286
    %289 = vst [vmem:[#allocation10 + $0x8] sm:$0xff] %v287
    // Predicated region
    $region38: #{tpu_custom_call.1} parent=1 // pred_check
      _
    $region39: #{tpu_custom_call.1} parent=1 // pred_check_branch
      %291 = sbr.rel (0) target = $region41
    $region40: #{tpu_custom_call.1} parent=1 // pred_region
      %s293 = ssub.s32 256, 256
      %294 = vsyncadd [#allocation4], %s293
      %s295 = sshll.u32 [#allocation10], 4
      %s296 = int_to_ptr.vmem [resolvable:$true] %s295
      %301 = dma.vmem_to_hbm [thread:$0]  %s296, 256, %s5, [#allocation4], 128, 128, 8
    $region41: #{tpu_custom_call.1} parent=1 // pred_fallthru
      _
    // Predicated region
    $region42: #{tpu_custom_call.1} parent=1 // pred_check
      _
    $region43: #{tpu_custom_call.1} parent=1 // pred_check_branch
      %303 = sbr.rel (0) target = $region45
    $region44: #{tpu_custom_call.1} parent=1 // pred_region
      %304 = dma.done [#allocation4], 256
    $region45: #{tpu_custom_call.1} parent=1 // pred_fallthru
      _
    %305 = vsyncpa [#allocation3], 1
    %306 = vsyncpa [#allocation6], 1
    %307 = vsyncpa [#allocation9], 1
    %308 = vsyncpa [#allocation4], 1

</llo_original>
